<compile_context>
chip_gen: v5e
topology: v5e:2x2
jax: 0.10.0
libtpu: 0.0.40
codegen_flags: <defaults>
</compile_context>

<pallas_src>
import functools

import jax
import jax.numpy as jnp
from jax.experimental import pallas as pl
from jax.experimental.pallas import tpu as pltpu

EPS = 1e-5
LANE = 128
SUBLANE = 8


def _round_up(x, m):
    return (x + m - 1) // m * m


# ---------------------------------------------------------------------------
# Pass 1: Linear(in,h1) + ReLU, Linear(h1,h2), per-tile BN partial statistics.
# ---------------------------------------------------------------------------
def _pass1_kernel(x_ref, w1_ref, b1_ref, w2_ref, b2_ref,
                  h2_ref, psum_ref, psq_ref,
                  *, n_valid, tile_n, compute_dtype):
    x = x_ref[...].astype(compute_dtype)

    h1 = jnp.dot(x, w1_ref[...], preferred_element_type=jnp.float32)
    h1 = jnp.maximum(h1 + b1_ref[...], 0.0)

    h2 = jnp.dot(h1.astype(compute_dtype), w2_ref[...],
                 preferred_element_type=jnp.float32) + b2_ref[...]

    # Rows beyond the true batch size are padding: exclude them from the
    # BatchNorm statistics so the stats stay global & exact under tiling.
    row0 = pl.program_id(0) * tile_n
    rows = row0 + jax.lax.broadcasted_iota(jnp.int32, (tile_n, 1), 0)
    h2_masked = jnp.where(rows < n_valid, h2, 0.0)

    psum_ref[...] = jnp.sum(h2_masked, axis=0, keepdims=True)[None]
    psq_ref[...] = jnp.sum(h2_masked * h2_masked, axis=0, keepdims=True)[None]
    h2_ref[...] = h2


# ---------------------------------------------------------------------------
# Pass 2: folded BatchNorm (h2*s + t) + ReLU + Linear(h2,out).
# ---------------------------------------------------------------------------
def _pass2_kernel(h2_ref, s_ref, t_ref, w3_ref, b3_ref, out_ref,
                  *, compute_dtype):
    h2r = jnp.maximum(h2_ref[...] * s_ref[...] + t_ref[...], 0.0)
    out = jnp.dot(h2r.astype(compute_dtype), w3_ref[...],
                  preferred_element_type=jnp.float32) + b3_ref[...]
    out_ref[...] = out.astype(out_ref.dtype)


@functools.partial(jax.jit, static_argnames=("tile_n", "compute_dtype"))
def mlp_forward(coords, params, *, tile_n=512, compute_dtype=jnp.bfloat16):
    """Fused MLP forward. Returns (output, coords) like the PyTorch module."""
    w1, b1, w2, b2, gamma, beta, w3, b3 = params
    n, d_in = coords.shape
    h1 = w1.shape[1]
    h2 = w2.shape[1]
    d_out = w3.shape[1]

    f32 = jnp.float32
    cdt = compute_dtype

    # Lane-dense padded feature widths + batch tiling.
    h1p = _round_up(h1, LANE)
    h2p = _round_up(h2, LANE)
    dop = _round_up(d_out, LANE)
    tile_n = min(tile_n, _round_up(n, SUBLANE))
    n_pad = _round_up(n, tile_n)
    n_tiles = n_pad // tile_n

    # Zero-padded params: padded weight rows/cols, biases and BN params are
    # zero, so padded lanes carry exact zeros through the whole network.
    xp = jnp.zeros((n_pad, d_in), f32).at[:n].set(coords.astype(f32))
    w1p = jnp.zeros((d_in, h1p), cdt).at[:, :h1].set(w1.astype(cdt))
    b1p = jnp.zeros((1, h1p), f32).at[:, :h1].set(b1.reshape(1, h1))
    w2p = jnp.zeros((h1p, h2p), cdt).at[:h1, :h2].set(w2.astype(cdt))
    b2p = jnp.zeros((1, h2p), f32).at[:, :h2].set(b2.reshape(1, h2))
    w3p = jnp.zeros((h2p, dop), cdt).at[:h2, :d_out].set(w3.astype(cdt))
    b3p = jnp.zeros((1, dop), f32).at[:, :d_out].set(b3.reshape(1, d_out))
    gp = jnp.zeros((h2p,), f32).at[:h2].set(gamma.reshape(h2))
    bp = jnp.zeros((h2p,), f32).at[:h2].set(beta.reshape(h2))

    const = lambda a: pl.BlockSpec(a.shape, lambda i: (0,) * a.ndim)
    cparams = pltpu.CompilerParams(
        dimension_semantics=("parallel",),
        vmem_limit_bytes=32 * 1024 * 1024,
    )

    # -------- Pass 1: x -> h2 (+ per-tile BN partial sums) -----------------
    kernel1 = functools.partial(
        _pass1_kernel, n_valid=n, tile_n=tile_n, compute_dtype=cdt)
    h2_full, psum, psq = pl.pallas_call(
        kernel1,
        grid=(n_tiles,),
        in_specs=[
            pl.BlockSpec((tile_n, d_in), lambda i: (i, 0)),
            const(w1p), const(b1p), const(w2p), const(b2p),
        ],
        out_specs=[
            pl.BlockSpec((tile_n, h2p), lambda i: (i, 0)),
            pl.BlockSpec((1, 1, h2p), lambda i: (i, 0, 0)),
            pl.BlockSpec((1, 1, h2p), lambda i: (i, 0, 0)),
        ],
        out_shape=[
            jax.ShapeDtypeStruct((n_pad, h2p), f32),
            jax.ShapeDtypeStruct((n_tiles, 1, h2p), f32),
            jax.ShapeDtypeStruct((n_tiles, 1, h2p), f32),
        ],
        compiler_params=cparams,
    )(xp, w1p, b1p, w2p, b2p)

    # -------- Global BatchNorm statistics (tiny, plain JAX) ----------------
    total = jnp.sum(psum[:, 0, :], axis=0)
    total_sq = jnp.sum(psq[:, 0, :], axis=0)
    mean = total / n
    var = jnp.maximum(total_sq / n - mean * mean, 0.0)    # biased variance
    s = (gp * jax.lax.rsqrt(var + EPS)).reshape(1, h2p)   # folded BN scale
    t = (bp - s.reshape(h2p) * mean).reshape(1, h2p)      # folded BN shift

    # -------- Pass 2: BN + ReLU + final Linear ------------------------------
    kernel2 = functools.partial(_pass2_kernel, compute_dtype=cdt)
    out_p = pl.pallas_call(
        kernel2,
        grid=(n_tiles,),
        in_specs=[
            pl.BlockSpec((tile_n, h2p), lambda i: (i, 0)),
            const(s), const(t), const(w3p), const(b3p),
        ],
        out_specs=pl.BlockSpec((tile_n, dop), lambda i: (i, 0)),
        out_shape=jax.ShapeDtypeStruct((n_pad, dop), f32),
        compiler_params=cparams,
    )(h2_full, s, t, w3p, b3p)

    out = out_p[:n, :d_out].astype(coords.dtype)
    return out, coords


def init_params(key, layer_dims):
    """Deterministic init mimicking PyTorch defaults.

    Linear: U(-1/sqrt(fan_in), 1/sqrt(fan_in)) for weight and bias.
    BatchNorm1d: weight=1, bias=0.
    Weights stored as (fan_in, fan_out) (transposed vs torch) for x @ W.
    """
    assert len(layer_dims) == 4, (
        "this instance fuses exactly one Linear+BN+ReLU hidden block")
    d_in, h1, h2, d_out = layer_dims
    keys = jax.random.split(key, 6)

    def linear(kw, kb, fan_in, fan_out):
        bound = 1.0 / jnp.sqrt(jnp.float32(fan_in))
        w = jax.random.uniform(kw, (fan_in, fan_out), jnp.float32, -bound, bound)
        b = jax.random.uniform(kb, (1, fan_out), jnp.float32, -bound, bound)
        return w, b

    w1, b1 = linear(keys[0], keys[1], d_in, h1)
    w2, b2 = linear(keys[2], keys[3], h1, h2)
    w3, b3 = linear(keys[4], keys[5], h2, d_out)
    gamma = jnp.ones((1, h2), jnp.float32)
    beta = jnp.zeros((1, h2), jnp.float32)
    return (w1, b1, w2, b2, gamma, beta, w3, b3)


def reference_forward(coords, params, compute_dtype=jnp.float32):
    """Plain-JAX reference (same matmul-operand dtype as the kernel)."""
    w1, b1, w2, b2, gamma, beta, w3, b3 = params
    cd = compute_dtype
    x = coords.astype(jnp.float32)
    h1 = jnp.maximum(
        jnp.dot(x.astype(cd), w1.astype(cd),
                preferred_element_type=jnp.float32) + b1, 0.0)
    h2 = jnp.dot(h1.astype(cd), w2.astype(cd),
                 preferred_element_type=jnp.float32) + b2
    mean = jnp.mean(h2, axis=0, keepdims=True)
    var = jnp.mean((h2 - mean) ** 2, axis=0, keepdims=True)
    h2n = gamma * (h2 - mean) * jax.lax.rsqrt(var + EPS) + beta
    h2r = jnp.maximum(h2n, 0.0)
    return jnp.dot(h2r.astype(cd), w3.astype(cd),
                   preferred_element_type=jnp.float32) + b3


if __name__ == "__main__":
    # layer_dims = [in, hidden, hidden, out] -> Linear+ReLU, Linear+BN+ReLU, Linear
    layer_dims = [4, 32, 32, 8]
    batch = 24                      # deliberately NOT a multiple of the tile

    key = jax.random.PRNGKey(0)
    k_x, k_p = jax.random.split(key)
    coords = jax.random.normal(k_x, (batch, layer_dims[0]), jnp.float32)
    params = init_params(k_p, layer_dims)

    # f32 path with a small batch tile -> 2 tiles + padded rows: exercises the
    # batch grid, megacore-safe two-pass BatchNorm and the padding mask.
    out32, coords_out = mlp_forward(coords, params, tile_n=16,
                                    compute_dtype=jnp.float32)
    out32 = jax.block_until_ready(out32)
    coords_out = jax.block_until_ready(coords_out)
    ref32 = reference_forward(coords, params, compute_dtype=jnp.float32)
    assert out32.shape == (batch, layer_dims[-1])
    assert coords_out.shape == coords.shape
    assert jnp.allclose(out32, ref32, atol=1e-4, rtol=1e-4), "f32 mismatch"

    # Default path: bf16 MXU operands, f32 accumulation / BN math.
    outbf, _ = mlp_forward(coords, params)
    outbf = jax.block_until_ready(outbf)
    refbf = reference_forward(coords, params, compute_dtype=jnp.bfloat16)
    assert jnp.allclose(outbf, refbf, atol=1e-2, rtol=1e-2), "bf16 mismatch"

    print("KERNEL_OK")
</pallas_src>

<mosaic_0001>
module attributes {stable_mosaic.version = 11 : i64} {
  func.func @_pass1_kernel(%arg0: i32, %arg1: memref<16x4xf32, #tpu.memory_space<vmem>>, %arg2: memref<4x128xf32, #tpu.memory_space<vmem>>, %arg3: memref<1x128xf32, #tpu.memory_space<vmem>>, %arg4: memref<128x128xf32, #tpu.memory_space<vmem>>, %arg5: memref<1x128xf32, #tpu.memory_space<vmem>>, %arg6: memref<16x128xf32, #tpu.memory_space<vmem>>, %arg7: memref<1x1x128xf32, #tpu.memory_space<vmem>>, %arg8: memref<1x1x128xf32, #tpu.memory_space<vmem>>) attributes {dimension_semantics = [#tpu.dimension_semantics<parallel>], iteration_bounds = array<i64: 2>, scalar_prefetch = 0 : i64, scratch_operands = 0 : i64, tpu.core_type = #tpu.core_type<tc>, window_params = [{transform_indices = @transform_0, window_bounds = array<i64: 16, 4>}, {pipeline_mode = #tpu.pipeline_mode<synchronous>, transform_indices = @transform_1, window_bounds = array<i64: 4, 128>}, {pipeline_mode = #tpu.pipeline_mode<synchronous>, transform_indices = @transform_2, window_bounds = array<i64: 1, 128>}, {pipeline_mode = #tpu.pipeline_mode<synchronous>, transform_indices = @transform_3, window_bounds = array<i64: 128, 128>}, {pipeline_mode = #tpu.pipeline_mode<synchronous>, transform_indices = @transform_4, window_bounds = array<i64: 1, 128>}, {transform_indices = @transform_5, window_bounds = array<i64: 16, 128>}, {transform_indices = @transform_6, window_bounds = array<i64: 1, 1, 128>}, {transform_indices = @transform_7, window_bounds = array<i64: 1, 1, 128>}]} {
    %c0 = arith.constant 0 : index
    %c0_0 = arith.constant 0 : index
    %0 = vector.load %arg1[%c0, %c0_0] : memref<16x4xf32, #tpu.memory_space<vmem>>, vector<16x4xf32>
    %c0_1 = arith.constant 0 : index
    %c0_2 = arith.constant 0 : index
    %1 = vector.load %arg2[%c0_1, %c0_2] : memref<4x128xf32, #tpu.memory_space<vmem>>, vector<4x128xf32>
    %cst = arith.constant dense<0.000000e+00> : vector<16x128xf32>
    %2 = tpu.matmul %0, %1, %cst {dimension_numbers = #tpu.dot_dimension_numbers<[1], [0], [0], [1], [0, 0, 1, 1], [], []>} : vector<16x4xf32>, vector<4x128xf32>, vector<16x128xf32> -> vector<16x128xf32>
    %c0_3 = arith.constant 0 : index
    %c0_4 = arith.constant 0 : index
    %3 = vector.load %arg3[%c0_3, %c0_4] : memref<1x128xf32, #tpu.memory_space<vmem>>, vector<1x128xf32>
    %4 = vector.broadcast %3 : vector<1x128xf32> to vector<16x128xf32>
    %5 = arith.addf %2, %4 : vector<16x128xf32>
    %cst_5 = arith.constant 0.000000e+00 : f32
    %6 = vector.broadcast %cst_5 : f32 to vector<16x128xf32>
    %7 = arith.maximumf %5, %6 : vector<16x128xf32>
    %c0_6 = arith.constant 0 : index
    %c0_7 = arith.constant 0 : index
    %8 = vector.load %arg4[%c0_6, %c0_7] : memref<128x128xf32, #tpu.memory_space<vmem>>, vector<128x128xf32>
    %cst_8 = arith.constant dense<0.000000e+00> : vector<16x128xf32>
    %9 = tpu.matmul %7, %8, %cst_8 {dimension_numbers = #tpu.dot_dimension_numbers<[1], [0], [0], [1], [0, 0, 1, 1], [], []>} : vector<16x128xf32>, vector<128x128xf32>, vector<16x128xf32> -> vector<16x128xf32>
    %c0_9 = arith.constant 0 : index
    %c0_10 = arith.constant 0 : index
    %10 = vector.load %arg5[%c0_9, %c0_10] : memref<1x128xf32, #tpu.memory_space<vmem>>, vector<1x128xf32>
    %11 = vector.broadcast %10 : vector<1x128xf32> to vector<16x128xf32>
    %12 = arith.addf %9, %11 : vector<16x128xf32>
    %c16_i32 = arith.constant 16 : i32
    %13 = arith.muli %arg0, %c16_i32 : i32
    %14 = tpu.iota {dimensions = array<i32: 0>} : vector<16x1xi32>
    %15 = vector.broadcast %13 : i32 to vector<16x1xi32>
    %16 = arith.addi %15, %14 : vector<16x1xi32>
    %c24_i32 = arith.constant 24 : i32
    %17 = vector.broadcast %c24_i32 : i32 to vector<16x1xi32>
    %18 = arith.cmpi slt, %16, %17 : vector<16x1xi32>
    %cst_11 = arith.constant 0.000000e+00 : f32
    %19 = vector.shape_cast %18 : vector<16x1xi1> to vector<16x1xi1>
    %20 = vector.broadcast %19 : vector<16x1xi1> to vector<16x128xi1>
    %21 = vector.broadcast %cst_11 : f32 to vector<16x128xf32>
    %22 = arith.select %20, %12, %21 : vector<16x128xi1>, vector<16x128xf32>
    %cst_12 = arith.constant dense<0.000000e+00> : vector<128xf32>
    %23 = vector.multi_reduction <add>, %22, %cst_12 [0] : vector<16x128xf32> to vector<128xf32>
    %24 = vector.shape_cast %23 : vector<128xf32> to vector<1x128xf32>
    %25 = vector.shape_cast %24 : vector<1x128xf32> to vector<1x1x128xf32>
    %c0_13 = arith.constant 0 : index
    %c0_14 = arith.constant 0 : index
    %c0_15 = arith.constant 0 : index
    %26 = vector.load %arg7[%c0_13, %c0_14, %c0_15] : memref<1x1x128xf32, #tpu.memory_space<vmem>>, vector<1x1x128xf32>
    tpu.vector_store %arg7[%c0_13, %c0_14, %c0_15], %25 {strides = array<i32>} : memref<1x1x128xf32, #tpu.memory_space<vmem>>, vector<1x1x128xf32>,
    %27 = arith.mulf %22, %22 : vector<16x128xf32>
    %cst_16 = arith.constant dense<0.000000e+00> : vector<128xf32>
    %28 = vector.multi_reduction <add>, %27, %cst_16 [0] : vector<16x128xf32> to vector<128xf32>
    %29 = vector.shape_cast %28 : vector<128xf32> to vector<1x128xf32>
    %30 = vector.shape_cast %29 : vector<1x128xf32> to vector<1x1x128xf32>
    %c0_17 = arith.constant 0 : index
    %c0_18 = arith.constant 0 : index
    %c0_19 = arith.constant 0 : index
    %31 = vector.load %arg8[%c0_17, %c0_18, %c0_19] : memref<1x1x128xf32, #tpu.memory_space<vmem>>, vector<1x1x128xf32>
    tpu.vector_store %arg8[%c0_17, %c0_18, %c0_19], %30 {strides = array<i32>} : memref<1x1x128xf32, #tpu.memory_space<vmem>>, vector<1x1x128xf32>,
    %c0_20 = arith.constant 0 : index
    %c0_21 = arith.constant 0 : index
    %32 = vector.load %arg6[%c0_20, %c0_21] : memref<16x128xf32, #tpu.memory_space<vmem>>, vector<16x128xf32>
    tpu.vector_store %arg6[%c0_20, %c0_21], %12 {strides = array<i32>} : memref<16x128xf32, #tpu.memory_space<vmem>>, vector<16x128xf32>,
    return
  }
  func.func @transform_0(%arg0: i32) -> (i32, i32) {
    %c0_i32 = arith.constant 0 : i32
    %c0_i32_0 = arith.constant 0 : i32
    return %arg0, %c0_i32 : i32, i32
  }
  func.func @transform_1(%arg0: i32) -> (i32, i32) {
    %c0_i32 = arith.constant 0 : i32
    %c0_i32_0 = arith.constant 0 : i32
    %c0_i32_1 = arith.constant 0 : i32
    return %c0_i32, %c0_i32_0 : i32, i32
  }
  func.func @transform_2(%arg0: i32) -> (i32, i32) {
    %c0_i32 = arith.constant 0 : i32
    %c0_i32_0 = arith.constant 0 : i32
    %c0_i32_1 = arith.constant 0 : i32
    return %c0_i32, %c0_i32_0 : i32, i32
  }
  func.func @transform_3(%arg0: i32) -> (i32, i32) {
    %c0_i32 = arith.constant 0 : i32
    %c0_i32_0 = arith.constant 0 : i32
    %c0_i32_1 = arith.constant 0 : i32
    return %c0_i32, %c0_i32_0 : i32, i32
  }
  func.func @transform_4(%arg0: i32) -> (i32, i32) {
    %c0_i32 = arith.constant 0 : i32
    %c0_i32_0 = arith.constant 0 : i32
    %c0_i32_1 = arith.constant 0 : i32
    return %c0_i32, %c0_i32_0 : i32, i32
  }
  func.func @transform_5(%arg0: i32) -> (i32, i32) {
    %c0_i32 = arith.constant 0 : i32
    %c0_i32_0 = arith.constant 0 : i32
    return %arg0, %c0_i32 : i32, i32
  }
  func.func @transform_6(%arg0: i32) -> (i32, i32, i32) {
    %c0_i32 = arith.constant 0 : i32
    %c0_i32_0 = arith.constant 0 : i32
    %c0_i32_1 = arith.constant 0 : i32
    return %arg0, %c0_i32, %c0_i32_0 : i32, i32, i32
  }
  func.func @transform_7(%arg0: i32) -> (i32, i32, i32) {
    %c0_i32 = arith.constant 0 : i32
    %c0_i32_0 = arith.constant 0 : i32
    %c0_i32_1 = arith.constant 0 : i32
    return %arg0, %c0_i32, %c0_i32_0 : i32, i32, i32
  }
}

module attributes {stable_mosaic.version = 11 : i64} {
  func.func @_pass2_kernel(%arg0: i32, %arg1: memref<16x128xf32, #tpu.memory_space<vmem>>, %arg2: memref<1x128xf32, #tpu.memory_space<vmem>>, %arg3: memref<1x128xf32, #tpu.memory_space<vmem>>, %arg4: memref<128x128xf32, #tpu.memory_space<vmem>>, %arg5: memref<1x128xf32, #tpu.memory_space<vmem>>, %arg6: memref<16x128xf32, #tpu.memory_space<vmem>>) attributes {dimension_semantics = [#tpu.dimension_semantics<parallel>], iteration_bounds = array<i64: 2>, scalar_prefetch = 0 : i64, scratch_operands = 0 : i64, tpu.core_type = #tpu.core_type<tc>, window_params = [{transform_indices = @transform_0, window_bounds = array<i64: 16, 128>}, {pipeline_mode = #tpu.pipeline_mode<synchronous>, transform_indices = @transform_1, window_bounds = array<i64: 1, 128>}, {pipeline_mode = #tpu.pipeline_mode<synchronous>, transform_indices = @transform_2, window_bounds = array<i64: 1, 128>}, {pipeline_mode = #tpu.pipeline_mode<synchronous>, transform_indices = @transform_3, window_bounds = array<i64: 128, 128>}, {pipeline_mode = #tpu.pipeline_mode<synchronous>, transform_indices = @transform_4, window_bounds = array<i64: 1, 128>}, {transform_indices = @transform_5, window_bounds = array<i64: 16, 128>}]} {
    %c0 = arith.constant 0 : index
    %c0_0 = arith.constant 0 : index
    %0 = vector.load %arg1[%c0, %c0_0] : memref<16x128xf32, #tpu.memory_space<vmem>>, vector<16x128xf32>
    %c0_1 = arith.constant 0 : index
    %c0_2 = arith.constant 0 : index
    %1 = vector.load %arg2[%c0_1, %c0_2] : memref<1x128xf32, #tpu.memory_space<vmem>>, vector<1x128xf32>
    %2 = vector.broadcast %1 : vector<1x128xf32> to vector<16x128xf32>
    %3 = arith.mulf %0, %2 : vector<16x128xf32>
    %c0_3 = arith.constant 0 : index
    %c0_4 = arith.constant 0 : index
    %4 = vector.load %arg3[%c0_3, %c0_4] : memref<1x128xf32, #tpu.memory_space<vmem>>, vector<1x128xf32>
    %5 = vector.broadcast %4 : vector<1x128xf32> to vector<16x128xf32>
    %6 = arith.addf %3, %5 : vector<16x128xf32>
    %cst = arith.constant 0.000000e+00 : f32
    %7 = vector.broadcast %cst : f32 to vector<16x128xf32>
    %8 = arith.maximumf %6, %7 : vector<16x128xf32>
    %c0_5 = arith.constant 0 : index
    %c0_6 = arith.constant 0 : index
    %9 = vector.load %arg4[%c0_5, %c0_6] : memref<128x128xf32, #tpu.memory_space<vmem>>, vector<128x128xf32>
    %cst_7 = arith.constant dense<0.000000e+00> : vector<16x128xf32>
    %10 = tpu.matmul %8, %9, %cst_7 {dimension_numbers = #tpu.dot_dimension_numbers<[1], [0], [0], [1], [0, 0, 1, 1], [], []>} : vector<16x128xf32>, vector<128x128xf32>, vector<16x128xf32> -> vector<16x128xf32>
    %c0_8 = arith.constant 0 : index
    %c0_9 = arith.constant 0 : index
    %11 = vector.load %arg5[%c0_8, %c0_9] : memref<1x128xf32, #tpu.memory_space<vmem>>, vector<1x128xf32>
    %12 = vector.broadcast %11 : vector<1x128xf32> to vector<16x128xf32>
    %13 = arith.addf %10, %12 : vector<16x128xf32>
    %c0_10 = arith.constant 0 : index
    %c0_11 = arith.constant 0 : index
    %14 = vector.load %arg6[%c0_10, %c0_11] : memref<16x128xf32, #tpu.memory_space<vmem>>, vector<16x128xf32>
    tpu.vector_store %arg6[%c0_10, %c0_11], %13 {strides = array<i32>} : memref<16x128xf32, #tpu.memory_space<vmem>>, vector<16x128xf32>,
    return
  }
  func.func @transform_0(%arg0: i32) -> (i32, i32) {
    %c0_i32 = arith.constant 0 : i32
    %c0_i32_0 = arith.constant 0 : i32
    return %arg0, %c0_i32 : i32, i32
  }
  func.func @transform_1(%arg0: i32) -> (i32, i32) {
    %c0_i32 = arith.constant 0 : i32
    %c0_i32_0 = arith.constant 0 : i32
    %c0_i32_1 = arith.constant 0 : i32
    return %c0_i32, %c0_i32_0 : i32, i32
  }
  func.func @transform_2(%arg0: i32) -> (i32, i32) {
    %c0_i32 = arith.constant 0 : i32
    %c0_i32_0 = arith.constant 0 : i32
    %c0_i32_1 = arith.constant 0 : i32
    return %c0_i32, %c0_i32_0 : i32, i32
  }
  func.func @transform_3(%arg0: i32) -> (i32, i32) {
    %c0_i32 = arith.constant 0 : i32
    %c0_i32_0 = arith.constant 0 : i32
    %c0_i32_1 = arith.constant 0 : i32
    return %c0_i32, %c0_i32_0 : i32, i32
  }
  func.func @transform_4(%arg0: i32) -> (i32, i32) {
    %c0_i32 = arith.constant 0 : i32
    %c0_i32_0 = arith.constant 0 : i32
    %c0_i32_1 = arith.constant 0 : i32
    return %c0_i32, %c0_i32_0 : i32, i32
  }
  func.func @transform_5(%arg0: i32) -> (i32, i32) {
    %c0_i32 = arith.constant 0 : i32
    %c0_i32_0 = arith.constant 0 : i32
    return %arg0, %c0_i32 : i32, i32
  }
}

</mosaic_0001>

<llo_original>
// kernel: mlp_forward.3
$region0: #{mlp_forward.3}
  #allocation0 [shape = 'u32[]', space=smem, size = 0x4, offset = 0x4, fixed_abs, tag = 'smem constant byte address 0x4 - core index']
  #allocation1 [shape = 'u32[72,128]{1,0:T(1,128)}', space=vmem, size = 0x9000, scoped, tag = 'internal scratch']
  %s0 = inlined_call_operand.vmem [shape: f32[32,128], index: 0, kind: input, shape index: {}]
  %s1 = inlined_call_operand.vmem [shape: f32[1,128], index: 1, kind: input, shape index: {}]
  %s2 = inlined_call_operand.vmem [shape: f32[1,128], index: 2, kind: input, shape index: {}]
  %s3 = inlined_call_operand.vmem [shape: f32[128,128], index: 3, kind: input, shape index: {}]
  %s4 = inlined_call_operand.vmem [shape: f32[1,128], index: 4, kind: input, shape index: {}]
  %s5 = inlined_call_operand.vmem [shape: f32[32,128], index: 5, kind: output, shape index: {}]
  %s6 = sld [smem:[#allocation0]]
  $region53: #{mlp_forward.3} parent=0
    _
  %s8 = ssub.s32 1, %s6
  %s9 = scalar_select 0, %s8, %s6
  loop: start=0, step=1, limit=4
  $region2: #{mlp_forward.3} parent=0 // loop_pre_header
    _
  $region3: #{mlp_forward.3} parent=0 // loop_header
    %s11 = sphi 0, %s15
    %p12 = scmp.ge.s32.totalorder %s11, 4
    %s21 = sphi 0, %s23
    %s24 = sphi 0, %s21
    %s25 = sphi 0, %s24
    %s41 = sphi 0, %s25
    %s45 = sphi 0, %s45
    %s47 = sphi 0, %s45
    %s48 = sphi 0, %s47
    %s62 = sphi 0, %s48
    %s66 = sphi 0, %s66
    %s68 = sphi 0, %s66
    %s69 = sphi 0, %s68
    %s83 = sphi 0, %s69
    %s87 = sphi 0, %s87
    %s89 = sphi 0, %s87
    %s90 = sphi 0, %s89
    %s104 = sphi 0, %s90
    %s108 = sphi 0, %s108
    %s110 = sphi 0, %s108
    %s111 = sphi 0, %s110
    %s125 = sphi 0, %s111
    %s131 = sphi 0, %s133
    %s134 = sphi 0, %s131
    %s135 = sphi 0, %s134
    %s151 = sphi 0, %s135
  $region4: #{mlp_forward.3} parent=0 // loop_header_branch
    %14 = sbr.rel (%p12) target = $region8
  $region5: #{mlp_forward.3} parent=0 // loop_body
    %s16 = ssub.s32 %s11, 1
    %s17 = ssub.s32 %s11, 2
    %s18 = sadd.s32 %s11, 1
    %s19 = ssub.s32 %s11, %s18
    %p20 = scmp.eq.s32.totalorder %s19, 0
    %s22 = sadd.s32 %s21, 1
    %s23 = scalar_select %p20, %s21, %s22
    %p26 = pneg %p20
    %p27 = scmp.eq.s32.totalorder %s11, 1
    %p28 = por %p26, %p27
    %p29 = scmp.ne.s32.totalorder %s21, %s24
    %p30 = scmp.eq.s32.totalorder %s11, 0
    %p31 = por %p29, %p30
    %p32 = scmp.ne.s32.totalorder %s21, %s24
    %p33 = scmp.eq.s32.totalorder %s16, 1
    %p34 = por %p32, %p33
    %p35 = scmp.ne.s32.totalorder %s24, %s25
    %p36 = scmp.eq.s32.totalorder %s16, 0
    %p37 = por %p35, %p36
    %p38 = scmp.ne.s32.totalorder %s24, %s25
    %p39 = scmp.eq.s32.totalorder %s17, 1
    %p40 = por %p38, %p39
    %p42 = scmp.ne.s32.totalorder %s25, %s41
    %p43 = scmp.eq.s32.totalorder %s17, 0
    %p44 = por %p42, %p43
    %s46 = sadd.s32 %s45, 1
    %p49 = scmp.eq.s32.totalorder %s11, 1
    %p50 = scmp.ne.s32.totalorder %s45, %s47
    %p51 = scmp.eq.s32.totalorder %s11, 0
    %p52 = por %p50, %p51
    %p53 = scmp.ne.s32.totalorder %s45, %s47
    %p54 = scmp.eq.s32.totalorder %s16, 1
    %p55 = por %p53, %p54
    %p56 = scmp.ne.s32.totalorder %s47, %s48
    %p57 = scmp.eq.s32.totalorder %s16, 0
    %p58 = por %p56, %p57
    %p59 = scmp.ne.s32.totalorder %s47, %s48
    %p60 = scmp.eq.s32.totalorder %s17, 1
    %p61 = por %p59, %p60
    %p63 = scmp.ne.s32.totalorder %s48, %s62
    %p64 = scmp.eq.s32.totalorder %s17, 0
    %p65 = por %p63, %p64
    %s67 = sadd.s32 %s66, 1
    %p70 = scmp.eq.s32.totalorder %s11, 1
    %p71 = scmp.ne.s32.totalorder %s66, %s68
    %p72 = scmp.eq.s32.totalorder %s11, 0
    %p73 = por %p71, %p72
    %p74 = scmp.ne.s32.totalorder %s66, %s68
    %p75 = scmp.eq.s32.totalorder %s16, 1
    %p76 = por %p74, %p75
    %p77 = scmp.ne.s32.totalorder %s68, %s69
    %p78 = scmp.eq.s32.totalorder %s16, 0
    %p79 = por %p77, %p78
    %p80 = scmp.ne.s32.totalorder %s68, %s69
    %p81 = scmp.eq.s32.totalorder %s17, 1
    %p82 = por %p80, %p81
    %p84 = scmp.ne.s32.totalorder %s69, %s83
    %p85 = scmp.eq.s32.totalorder %s17, 0
    %p86 = por %p84, %p85
    %s88 = sadd.s32 %s87, 1
    %p91 = scmp.eq.s32.totalorder %s11, 1
    %p92 = scmp.ne.s32.totalorder %s87, %s89
    %p93 = scmp.eq.s32.totalorder %s11, 0
    %p94 = por %p92, %p93
    %p95 = scmp.ne.s32.totalorder %s87, %s89
    %p96 = scmp.eq.s32.totalorder %s16, 1
    %p97 = por %p95, %p96
    %p98 = scmp.ne.s32.totalorder %s89, %s90
    %p99 = scmp.eq.s32.totalorder %s16, 0
    %p100 = por %p98, %p99
    %p101 = scmp.ne.s32.totalorder %s89, %s90
    %p102 = scmp.eq.s32.totalorder %s17, 1
    %p103 = por %p101, %p102
    %p105 = scmp.ne.s32.totalorder %s90, %s104
    %p106 = scmp.eq.s32.totalorder %s17, 0
    %p107 = por %p105, %p106
    %s109 = sadd.s32 %s108, 1
    %p112 = scmp.eq.s32.totalorder %s11, 1
    %p113 = scmp.ne.s32.totalorder %s108, %s110
    %p114 = scmp.eq.s32.totalorder %s11, 0
    %p115 = por %p113, %p114
    %p116 = scmp.ne.s32.totalorder %s108, %s110
    %p117 = scmp.eq.s32.totalorder %s16, 1
    %p118 = por %p116, %p117
    %p119 = scmp.ne.s32.totalorder %s110, %s111
    %p120 = scmp.eq.s32.totalorder %s16, 0
    %p121 = por %p119, %p120
    %p122 = scmp.ne.s32.totalorder %s110, %s111
    %p123 = scmp.eq.s32.totalorder %s17, 1
    %p124 = por %p122, %p123
    %p126 = scmp.ne.s32.totalorder %s111, %s125
    %p127 = scmp.eq.s32.totalorder %s17, 0
    %p128 = por %p126, %p127
    %s129 = ssub.s32 %s11, %s18
    %p130 = scmp.eq.s32.totalorder %s129, 0
    %s132 = sadd.s32 %s131, 1
    %s133 = scalar_select %p130, %s131, %s132
    %p136 = pneg %p130
    %p137 = scmp.eq.s32.totalorder %s11, 1
    %p138 = por %p136, %p137
    %p139 = scmp.ne.s32.totalorder %s131, %s134
    %p140 = scmp.eq.s32.totalorder %s11, 0
    %p141 = por %p139, %p140
    %p142 = scmp.ne.s32.totalorder %s131, %s134
    %p143 = scmp.eq.s32.totalorder %s16, 1
    %p144 = por %p142, %p143
    %p145 = scmp.ne.s32.totalorder %s134, %s135
    %p146 = scmp.eq.s32.totalorder %s16, 0
    %p147 = por %p145, %p146
    %p148 = scmp.ne.s32.totalorder %s134, %s135
    %p149 = scmp.eq.s32.totalorder %s17, 1
    %p150 = por %p148, %p149
    %p152 = scmp.ne.s32.totalorder %s135, %s151
    %p153 = scmp.eq.s32.totalorder %s17, 0
    %p154 = por %p152, %p153
    %p155 = scmp.le.s32.totalorder 1, %s11
    %p156 = scmp.lt.s32.totalorder %s11, 3
    %p157 = pnand %p155, %p156
    %p158 = pneg %p157
    // Predicated region
    $region9: #{mlp_forward.3} parent=5 // pred_check
      _
    $region10: #{mlp_forward.3} parent=5 // pred_check_branch
      %160 = sbr.rel (%p157) target = $region12
    $region11: #{mlp_forward.3} parent=5 // pred_region
      %s161 = ssub.s32 %s11, 1
      // Predicated region
      $region13: #{mlp_forward.3} parent=11 // pred_check
        %p162 = pneg %p58
      $region14: #{mlp_forward.3} parent=11 // pred_check_branch
        %164 = sbr.rel (%p162) target = $region16
      $region15: #{mlp_forward.3} parent=11 // pred_region
        _
      $region16: #{mlp_forward.3} parent=11 // pred_fallthru
        _
      // Predicated region
      $region17: #{mlp_forward.3} parent=11 // pred_check
        %p165 = pneg %p79
      $region18: #{mlp_forward.3} parent=11 // pred_check_branch
        %167 = sbr.rel (%p165) target = $region20
      $region19: #{mlp_forward.3} parent=11 // pred_region
        _
      $region20: #{mlp_forward.3} parent=11 // pred_fallthru
        _
      // Predicated region
      $region21: #{mlp_forward.3} parent=11 // pred_check
        %p168 = pneg %p100
      $region22: #{mlp_forward.3} parent=11 // pred_check_branch
        %170 = sbr.rel (%p168) target = $region24
      $region23: #{mlp_forward.3} parent=11 // pred_region
        _
      $region24: #{mlp_forward.3} parent=11 // pred_fallthru
        _
      // Predicated region
      $region25: #{mlp_forward.3} parent=11 // pred_check
        %p171 = pneg %p121
      $region26: #{mlp_forward.3} parent=11 // pred_check_branch
        %173 = sbr.rel (%p171) target = $region28
      $region27: #{mlp_forward.3} parent=11 // pred_region
        _
      $region28: #{mlp_forward.3} parent=11 // pred_fallthru
        _
    $region12: #{mlp_forward.3} parent=5 // pred_fallthru
      _
    %p174 = scmp.lt.s32.totalorder %s11, 2
    // Predicated region
    $region29: #{mlp_forward.3} parent=5 // pred_check
      %p175 = pneg %p174
    $region30: #{mlp_forward.3} parent=5 // pred_check_branch
      %177 = sbr.rel (%p175) target = $region32
    $region31: #{mlp_forward.3} parent=5 // pred_region
      // Predicated region
      $region33: #{mlp_forward.3} parent=31 // pred_check
        %p178 = pneg %p31
      $region34: #{mlp_forward.3} parent=31 // pred_check_branch
        %180 = sbr.rel (%p178) target = $region36
      $region35: #{mlp_forward.3} parent=31 // pred_region
        %s181 = smul.u32 2, %s11
        %p182 = scmp.lt.s32.totalorder %s181, 3
        %s183 = scalar_select %p182, %s181, 3
        %s184 = smul.addr %s183, 8
        %s185 = scalar_lea.vmem %s0, %s184
        %s186 = smul.u32 2, %s11
      $region36: #{mlp_forward.3} parent=31 // pred_fallthru
        _
    $region32: #{mlp_forward.3} parent=5 // pred_fallthru
      _
    %p187 = scmp.le.s32.totalorder 1, %s11
    %p188 = scmp.lt.s32.totalorder %s11, 3
    %p189 = pnand %p187, %p188
    %p190 = pneg %p189
    // Predicated region
    $region37: #{mlp_forward.3} parent=5 // pred_check
      _
    $region38: #{mlp_forward.3} parent=5 // pred_check_branch
      %192 = sbr.rel (%p189) target = $region40
    $region39: #{mlp_forward.3} parent=5 // pred_region
      %s193 = ssub.s32 %s11, 1
      %s194 = smul.u32 2, %s16
      %p195 = scmp.lt.s32.totalorder %s194, 3
      %s196 = scalar_select %p195, %s194, 3
      %s197 = smul.addr %s196, 8
      %s198 = scalar_lea.vmem %s0, %s197
      %p199 = pneg %p37
      %p200 = pneg %p34
      %p201 = pneg %p58
      %p202 = pneg %p55
      %p203 = pneg %p79
      %p204 = pneg %p76
      %p205 = pneg %p100
      %p206 = pneg %p97
      %p207 = pneg %p121
      %p208 = pneg %p118
      %p209 = pneg %p147
      %p210 = pneg %p144
      %s211 = smul.u32 2, %s16
      %p212 = scmp.lt.s32.totalorder %s211, 3
      %s213 = scalar_select %p212, %s211, 3
      %s214 = smul.addr %s213, 8
      %s215 = scalar_lea.vmem %s5, %s214
      %s216 = smul.u32 2, %s16
      %p217 = scmp.lt.s32.totalorder %s216, 3
      %s218 = scalar_select %p217, %s216, 3
      %s219 = smul.addr %s218, 8
      %s220 = scalar_lea.vmem %s0, %s219
      %s221 = smul.u32 2, %s16
      %s222 = smul.u32 2, %s16
      %p223 = scmp.lt.s32.totalorder %s222, 3
      %s224 = scalar_select %p223, %s222, 3
      %s225 = smul.addr %s224, 8
      %s226 = scalar_lea.vmem %s5, %s225
      %s227 = smul.u32 2, %s16
      %v228 = vld [vmem:[%s220] sm:$0xff]
      %v229 = vld [vmem:[%s220 + $0x8] sm:$0xff]
      %v230 = vld [vmem:[%s1] sm:$0x1]
      %v232 = vperm.slane %v230, 0
      %v234 = vmul.f32 %v228, %v232
      %v235 = vmul.f32 %v229, %v232
      %v236 = vld [vmem:[%s2] sm:$0x1]
      %v238 = vperm.slane %v236, 0
      %v240 = vadd.f32 %v234, %v238
      %v241 = vadd.f32 %v235, %v238
      %v242 = vmax.f32 %v240, 0.0
      %v243 = vmax.f32 %v241, 0.0
      %v244 = vld [vmem:[%s3] sm:$0xff]
      %v245 = vld [vmem:[%s3 + $0x8] sm:$0xff]
      %v246 = vld [vmem:[%s3 + $0x10] sm:$0xff]
      %v247 = vld [vmem:[%s3 + $0x18] sm:$0xff]
      %v248 = vld [vmem:[%s3 + $0x20] sm:$0xff]
      %v249 = vld [vmem:[%s3 + $0x28] sm:$0xff]
      %v250 = vld [vmem:[%s3 + $0x30] sm:$0xff]
      %v251 = vld [vmem:[%s3 + $0x38] sm:$0xff]
      %v252 = vld [vmem:[%s3 + $0x40] sm:$0xff]
      %v253 = vld [vmem:[%s3 + $0x48] sm:$0xff]
      %v254 = vld [vmem:[%s3 + $0x50] sm:$0xff]
      %v255 = vld [vmem:[%s3 + $0x58] sm:$0xff]
      %v256 = vld [vmem:[%s3 + $0x60] sm:$0xff]
      %v257 = vld [vmem:[%s3 + $0x68] sm:$0xff]
      %v258 = vld [vmem:[%s3 + $0x70] sm:$0xff]
      %v259 = vld [vmem:[%s3 + $0x78] sm:$0xff]
      %v260 = vld [vmem:[%s4] sm:$0x1]
      %v262 = vperm.slane %v260, 0
      %264 = vmatpush.msra.mxu0 %v259
      %265 = vmatpush.msra.mxu0 %v258
      %266 = vmatpush.msra.mxu0 %v257
      %267 = vmatpush.msra.mxu0 %v256
      %268 = vmatpush.msra.mxu0 %v255
      %269 = vmatpush.msra.mxu0 %v254
      %270 = vmatpush.msra.mxu0 %v253
      %271 = vmatpush.msra.mxu0 %v252
      %272 = vmatpush.msra.mxu0 %v251
      %273 = vmatpush.msra.mxu0 %v250
      %274 = vmatpush.msra.mxu0 %v249
      %275 = vmatpush.msra.mxu0 %v248
      %276 = vmatpush.msra.mxu0 %v247
      %277 = vmatpush.msra.mxu0 %v246
      %278 = vmatpush.msra.mxu0 %v245
      %279 = vmatpush.msra.mxu0 %v244
      %280 = vmatmul.f32.gmra.mxu0 %v242
      %v281 = vpop.f32.mrf.mxu0
      %v282 = vadd.f32 %v262, %v281
      %283 = vmatmul.f32.gmra.mxu0 %v243
      %v284 = vpop.f32.mrf.mxu0
      %v285 = vadd.f32 %v262, %v284
      %286 = vdwg.mxu0
      %287 = vst [vmem:[%s226] sm:$0xff] %v282
      %288 = vst [vmem:[%s226 + $0x8] sm:$0xff] %v285
      %s289 = smul.u32 2, %s16
      %p290 = scmp.lt.s32.totalorder %s289, 3
      %s291 = scalar_select %p290, %s289, 3
      %s292 = smul.addr %s291, 8
      %s293 = scalar_lea.vmem %s5, %s292
      // Predicated region
      $region41: #{mlp_forward.3} parent=39 // pred_check
        %p294 = pneg %p144
      $region42: #{mlp_forward.3} parent=39 // pred_check_branch
        %296 = sbr.rel (%p294) target = $region44
      $region43: #{mlp_forward.3} parent=39 // pred_region
        %s297 = smul.u32 2, %s16
      $region44: #{mlp_forward.3} parent=39 // pred_fallthru
        _
    $region40: #{mlp_forward.3} parent=5 // pred_fallthru
      _
    %p298 = scmp.le.s32.totalorder 2, %s11
    // Predicated region
    $region45: #{mlp_forward.3} parent=5 // pred_check
      %p299 = pneg %p298
    $region46: #{mlp_forward.3} parent=5 // pred_check_branch
      %301 = sbr.rel (%p299) target = $region48
    $region47: #{mlp_forward.3} parent=5 // pred_region
      %s302 = ssub.s32 %s11, 2
      // Predicated region
      $region49: #{mlp_forward.3} parent=47 // pred_check
        %p303 = pneg %p150
      $region50: #{mlp_forward.3} parent=47 // pred_check_branch
        %305 = sbr.rel (%p303) target = $region52
      $region51: #{mlp_forward.3} parent=47 // pred_region
        %s306 = smul.u32 2, %s17
        %p307 = scmp.lt.s32.totalorder %s306, 3
        %s308 = scalar_select %p307, %s306, 3
        %s309 = smul.addr %s308, 8
        %s310 = scalar_lea.vmem %s5, %s309
      $region52: #{mlp_forward.3} parent=47 // pred_fallthru
        _
    $region48: #{mlp_forward.3} parent=5 // pred_fallthru
      _
  $region6: #{mlp_forward.3} parent=0 // loop_footer
    %s15 = sadd.s32 1, %s11
  $region7: #{mlp_forward.3} parent=0 // loop_footer_branch
    %10 = sbr.rel target = $region3
  $region8: #{mlp_forward.3} parent=0 // loop_exit
    _

// kernel: mlp_forward.2
$region0: #{mlp_forward.2}
  #allocation0 [shape = 'u32[]', space=smem, size = 0x4, offset = 0x4, fixed_abs, tag = 'smem constant byte address 0x4 - core index']
  #allocation1 [shape = 'u32[72,128]{1,0:T(1,128)}', space=vmem, size = 0x9000, scoped, tag = 'internal scratch']
  %s0 = inlined_call_operand.vmem [shape: f32[32,4], index: 0, kind: input, shape index: {}]
  %s1 = inlined_call_operand.vmem [shape: f32[4,128], index: 1, kind: input, shape index: {}]
  %s2 = inlined_call_operand.vmem [shape: f32[1,128], index: 2, kind: input, shape index: {}]
  %s3 = inlined_call_operand.vmem [shape: f32[128,128], index: 3, kind: input, shape index: {}]
  %s4 = inlined_call_operand.vmem [shape: f32[1,128], index: 4, kind: input, shape index: {}]
  %s5 = inlined_call_operand.vmem [shape: f32[32,128], index: 5, kind: output, shape index: {0}]
  %s6 = inlined_call_operand.vmem [shape: f32[2,1,128], index: 6, kind: output, shape index: {1}]
  %s7 = inlined_call_operand.vmem [shape: f32[2,1,128], index: 7, kind: output, shape index: {2}]
  %8 = xla_tuple %s5, %s6, %s7
  %s9 = sld [smem:[#allocation0]]
  $region69: #{mlp_forward.2} parent=0
    _
  %s11 = ssub.s32 1, %s9
  %s12 = scalar_select 0, %s11, %s9
  loop: start=0, step=1, limit=4
  $region2: #{mlp_forward.2} parent=0 // loop_pre_header
    _
  $region3: #{mlp_forward.2} parent=0 // loop_header
    %s14 = sphi 0, %s18
    %p15 = scmp.ge.s32.totalorder %s14, 4
    %s24 = sphi 0, %s26
    %s27 = sphi 0, %s24
    %s28 = sphi 0, %s27
    %s44 = sphi 0, %s28
    %s48 = sphi 0, %s48
    %s50 = sphi 0, %s48
    %s51 = sphi 0, %s50
    %s65 = sphi 0, %s51
    %s69 = sphi 0, %s69
    %s71 = sphi 0, %s69
    %s72 = sphi 0, %s71
    %s86 = sphi 0, %s72
    %s90 = sphi 0, %s90
    %s92 = sphi 0, %s90
    %s93 = sphi 0, %s92
    %s107 = sphi 0, %s93
    %s111 = sphi 0, %s111
    %s113 = sphi 0, %s111
    %s114 = sphi 0, %s113
    %s128 = sphi 0, %s114
    %s134 = sphi 0, %s136
    %s137 = sphi 0, %s134
    %s138 = sphi 0, %s137
    %s154 = sphi 0, %s138
    %s160 = sphi 0, %s162
    %s163 = sphi 0, %s160
    %s164 = sphi 0, %s163
    %s180 = sphi 0, %s164
    %s186 = sphi 0, %s188
    %s189 = sphi 0, %s186
    %s190 = sphi 0, %s189
    %s206 = sphi 0, %s190
  $region4: #{mlp_forward.2} parent=0 // loop_header_branch
    %17 = sbr.rel (%p15) target = $region8
  $region5: #{mlp_forward.2} parent=0 // loop_body
    %s19 = ssub.s32 %s14, 1
    %s20 = ssub.s32 %s14, 2
    %s21 = sadd.s32 %s14, 1
    %s22 = ssub.s32 %s14, %s21
    %p23 = scmp.eq.s32.totalorder %s22, 0
    %s25 = sadd.s32 %s24, 1
    %s26 = scalar_select %p23, %s24, %s25
    %p29 = pneg %p23
    %p30 = scmp.eq.s32.totalorder %s14, 1
    %p31 = por %p29, %p30
    %p32 = scmp.ne.s32.totalorder %s24, %s27
    %p33 = scmp.eq.s32.totalorder %s14, 0
    %p34 = por %p32, %p33
    %p35 = scmp.ne.s32.totalorder %s24, %s27
    %p36 = scmp.eq.s32.totalorder %s19, 1
    %p37 = por %p35, %p36
    %p38 = scmp.ne.s32.totalorder %s27, %s28
    %p39 = scmp.eq.s32.totalorder %s19, 0
    %p40 = por %p38, %p39
    %p41 = scmp.ne.s32.totalorder %s27, %s28
    %p42 = scmp.eq.s32.totalorder %s20, 1
    %p43 = por %p41, %p42
    %p45 = scmp.ne.s32.totalorder %s28, %s44
    %p46 = scmp.eq.s32.totalorder %s20, 0
    %p47 = por %p45, %p46
    %s49 = sadd.s32 %s48, 1
    %p52 = scmp.eq.s32.totalorder %s14, 1
    %p53 = scmp.ne.s32.totalorder %s48, %s50
    %p54 = scmp.eq.s32.totalorder %s14, 0
    %p55 = por %p53, %p54
    %p56 = scmp.ne.s32.totalorder %s48, %s50
    %p57 = scmp.eq.s32.totalorder %s19, 1
    %p58 = por %p56, %p57
    %p59 = scmp.ne.s32.totalorder %s50, %s51
    %p60 = scmp.eq.s32.totalorder %s19, 0
    %p61 = por %p59, %p60
    %p62 = scmp.ne.s32.totalorder %s50, %s51
    %p63 = scmp.eq.s32.totalorder %s20, 1
    %p64 = por %p62, %p63
    %p66 = scmp.ne.s32.totalorder %s51, %s65
    %p67 = scmp.eq.s32.totalorder %s20, 0
    %p68 = por %p66, %p67
    %s70 = sadd.s32 %s69, 1
    %p73 = scmp.eq.s32.totalorder %s14, 1
    %p74 = scmp.ne.s32.totalorder %s69, %s71
    %p75 = scmp.eq.s32.totalorder %s14, 0
    %p76 = por %p74, %p75
    %p77 = scmp.ne.s32.totalorder %s69, %s71
    %p78 = scmp.eq.s32.totalorder %s19, 1
    %p79 = por %p77, %p78
    %p80 = scmp.ne.s32.totalorder %s71, %s72
    %p81 = scmp.eq.s32.totalorder %s19, 0
    %p82 = por %p80, %p81
    %p83 = scmp.ne.s32.totalorder %s71, %s72
    %p84 = scmp.eq.s32.totalorder %s20, 1
    %p85 = por %p83, %p84
    %p87 = scmp.ne.s32.totalorder %s72, %s86
    %p88 = scmp.eq.s32.totalorder %s20, 0
    %p89 = por %p87, %p88
    %s91 = sadd.s32 %s90, 1
    %p94 = scmp.eq.s32.totalorder %s14, 1
    %p95 = scmp.ne.s32.totalorder %s90, %s92
    %p96 = scmp.eq.s32.totalorder %s14, 0
    %p97 = por %p95, %p96
    %p98 = scmp.ne.s32.totalorder %s90, %s92
    %p99 = scmp.eq.s32.totalorder %s19, 1
    %p100 = por %p98, %p99
    %p101 = scmp.ne.s32.totalorder %s92, %s93
    %p102 = scmp.eq.s32.totalorder %s19, 0
    %p103 = por %p101, %p102
    %p104 = scmp.ne.s32.totalorder %s92, %s93
    %p105 = scmp.eq.s32.totalorder %s20, 1
    %p106 = por %p104, %p105
    %p108 = scmp.ne.s32.totalorder %s93, %s107
    %p109 = scmp.eq.s32.totalorder %s20, 0
    %p110 = por %p108, %p109
    %s112 = sadd.s32 %s111, 1
    %p115 = scmp.eq.s32.totalorder %s14, 1
    %p116 = scmp.ne.s32.totalorder %s111, %s113
    %p117 = scmp.eq.s32.totalorder %s14, 0
    %p118 = por %p116, %p117
    %p119 = scmp.ne.s32.totalorder %s111, %s113
    %p120 = scmp.eq.s32.totalorder %s19, 1
    %p121 = por %p119, %p120
    %p122 = scmp.ne.s32.totalorder %s113, %s114
    %p123 = scmp.eq.s32.totalorder %s19, 0
    %p124 = por %p122, %p123
    %p125 = scmp.ne.s32.totalorder %s113, %s114
    %p126 = scmp.eq.s32.totalorder %s20, 1
    %p127 = por %p125, %p126
    %p129 = scmp.ne.s32.totalorder %s114, %s128
    %p130 = scmp.eq.s32.totalorder %s20, 0
    %p131 = por %p129, %p130
    %s132 = ssub.s32 %s14, %s21
    %p133 = scmp.eq.s32.totalorder %s132, 0
    %s135 = sadd.s32 %s134, 1
    %s136 = scalar_select %p133, %s134, %s135
    %p139 = pneg %p133
    %p140 = scmp.eq.s32.totalorder %s14, 1
    %p141 = por %p139, %p140
    %p142 = scmp.ne.s32.totalorder %s134, %s137
    %p143 = scmp.eq.s32.totalorder %s14, 0
    %p144 = por %p142, %p143
    %p145 = scmp.ne.s32.totalorder %s134, %s137
    %p146 = scmp.eq.s32.totalorder %s19, 1
    %p147 = por %p145, %p146
    %p148 = scmp.ne.s32.totalorder %s137, %s138
    %p149 = scmp.eq.s32.totalorder %s19, 0
    %p150 = por %p148, %p149
    %p151 = scmp.ne.s32.totalorder %s137, %s138
    %p152 = scmp.eq.s32.totalorder %s20, 1
    %p153 = por %p151, %p152
    %p155 = scmp.ne.s32.totalorder %s138, %s154
    %p156 = scmp.eq.s32.totalorder %s20, 0
    %p157 = por %p155, %p156
    %s158 = ssub.s32 %s14, %s21
    %p159 = scmp.eq.s32.totalorder %s158, 0
    %s161 = sadd.s32 %s160, 1
    %s162 = scalar_select %p159, %s160, %s161
    %p165 = pneg %p159
    %p166 = scmp.eq.s32.totalorder %s14, 1
    %p167 = por %p165, %p166
    %p168 = scmp.ne.s32.totalorder %s160, %s163
    %p169 = scmp.eq.s32.totalorder %s14, 0
    %p170 = por %p168, %p169
    %p171 = scmp.ne.s32.totalorder %s160, %s163
    %p172 = scmp.eq.s32.totalorder %s19, 1
    %p173 = por %p171, %p172
    %p174 = scmp.ne.s32.totalorder %s163, %s164
    %p175 = scmp.eq.s32.totalorder %s19, 0
    %p176 = por %p174, %p175
    %p177 = scmp.ne.s32.totalorder %s163, %s164
    %p178 = scmp.eq.s32.totalorder %s20, 1
    %p179 = por %p177, %p178
    %p181 = scmp.ne.s32.totalorder %s164, %s180
    %p182 = scmp.eq.s32.totalorder %s20, 0
    %p183 = por %p181, %p182
    %s184 = ssub.s32 %s14, %s21
    %p185 = scmp.eq.s32.totalorder %s184, 0
    %s187 = sadd.s32 %s186, 1
    %s188 = scalar_select %p185, %s186, %s187
    %p191 = pneg %p185
    %p192 = scmp.eq.s32.totalorder %s14, 1
    %p193 = por %p191, %p192
    %p194 = scmp.ne.s32.totalorder %s186, %s189
    %p195 = scmp.eq.s32.totalorder %s14, 0
    %p196 = por %p194, %p195
    %p197 = scmp.ne.s32.totalorder %s186, %s189
    %p198 = scmp.eq.s32.totalorder %s19, 1
    %p199 = por %p197, %p198
    %p200 = scmp.ne.s32.totalorder %s189, %s190
    %p201 = scmp.eq.s32.totalorder %s19, 0
    %p202 = por %p200, %p201
    %p203 = scmp.ne.s32.totalorder %s189, %s190
    %p204 = scmp.eq.s32.totalorder %s20, 1
    %p205 = por %p203, %p204
    %p207 = scmp.ne.s32.totalorder %s190, %s206
    %p208 = scmp.eq.s32.totalorder %s20, 0
    %p209 = por %p207, %p208
    %p210 = scmp.le.s32.totalorder 1, %s14
    %p211 = scmp.lt.s32.totalorder %s14, 3
    %p212 = pnand %p210, %p211
    %p213 = pneg %p212
    // Predicated region
    $region9: #{mlp_forward.2} parent=5 // pred_check
      _
    $region10: #{mlp_forward.2} parent=5 // pred_check_branch
      %215 = sbr.rel (%p212) target = $region12
    $region11: #{mlp_forward.2} parent=5 // pred_region
      %s216 = ssub.s32 %s14, 1
      // Predicated region
      $region13: #{mlp_forward.2} parent=11 // pred_check
        %p217 = pneg %p61
      $region14: #{mlp_forward.2} parent=11 // pred_check_branch
        %219 = sbr.rel (%p217) target = $region16
      $region15: #{mlp_forward.2} parent=11 // pred_region
        _
      $region16: #{mlp_forward.2} parent=11 // pred_fallthru
        _
      // Predicated region
      $region17: #{mlp_forward.2} parent=11 // pred_check
        %p220 = pneg %p82
      $region18: #{mlp_forward.2} parent=11 // pred_check_branch
        %222 = sbr.rel (%p220) target = $region20
      $region19: #{mlp_forward.2} parent=11 // pred_region
        _
      $region20: #{mlp_forward.2} parent=11 // pred_fallthru
        _
      // Predicated region
      $region21: #{mlp_forward.2} parent=11 // pred_check
        %p223 = pneg %p103
      $region22: #{mlp_forward.2} parent=11 // pred_check_branch
        %225 = sbr.rel (%p223) target = $region24
      $region23: #{mlp_forward.2} parent=11 // pred_region
        _
      $region24: #{mlp_forward.2} parent=11 // pred_fallthru
        _
      // Predicated region
      $region25: #{mlp_forward.2} parent=11 // pred_check
        %p226 = pneg %p124
      $region26: #{mlp_forward.2} parent=11 // pred_check_branch
        %228 = sbr.rel (%p226) target = $region28
      $region27: #{mlp_forward.2} parent=11 // pred_region
        _
      $region28: #{mlp_forward.2} parent=11 // pred_fallthru
        _
    $region12: #{mlp_forward.2} parent=5 // pred_fallthru
      _
    %p229 = scmp.lt.s32.totalorder %s14, 2
    // Predicated region
    $region29: #{mlp_forward.2} parent=5 // pred_check
      %p230 = pneg %p229
    $region30: #{mlp_forward.2} parent=5 // pred_check_branch
      %232 = sbr.rel (%p230) target = $region32
    $region31: #{mlp_forward.2} parent=5 // pred_region
      // Predicated region
      $region33: #{mlp_forward.2} parent=31 // pred_check
        %p233 = pneg %p34
      $region34: #{mlp_forward.2} parent=31 // pred_check_branch
        %235 = sbr.rel (%p233) target = $region36
      $region35: #{mlp_forward.2} parent=31 // pred_region
        %s236 = smul.u32 2, %s14
        %p237 = scmp.lt.s32.totalorder %s236, 3
        %s238 = scalar_select %p237, %s236, 3
        %s239 = smul.addr %s238, 8
        %s240 = scalar_lea.vmem %s0, %s239
        %s241 = smul.u32 2, %s14
      $region36: #{mlp_forward.2} parent=31 // pred_fallthru
        _
    $region32: #{mlp_forward.2} parent=5 // pred_fallthru
      _
    %p242 = scmp.le.s32.totalorder 1, %s14
    %p243 = scmp.lt.s32.totalorder %s14, 3
    %p244 = pnand %p242, %p243
    %p245 = pneg %p244
    // Predicated region
    $region37: #{mlp_forward.2} parent=5 // pred_check
      _
    $region38: #{mlp_forward.2} parent=5 // pred_check_branch
      %247 = sbr.rel (%p244) target = $region40
    $region39: #{mlp_forward.2} parent=5 // pred_region
      %s248 = ssub.s32 %s14, 1
      %s249 = smul.u32 2, %s19
      %p250 = scmp.lt.s32.totalorder %s249, 3
      %s251 = scalar_select %p250, %s249, 3
      %s252 = smul.addr %s251, 8
      %s253 = scalar_lea.vmem %s0, %s252
      %p254 = pneg %p40
      %p255 = pneg %p37
      %p256 = pneg %p61
      %p257 = pneg %p58
      %p258 = pneg %p82
      %p259 = pneg %p79
      %p260 = pneg %p103
      %p261 = pneg %p100
      %p262 = pneg %p124
      %p263 = pneg %p121
      %p264 = pneg %p150
      %p265 = pneg %p147
      %s266 = smul.u32 2, %s19
      %p267 = scmp.lt.s32.totalorder %s266, 3
      %s268 = scalar_select %p267, %s266, 3
      %s269 = smul.addr %s268, 8
      %s270 = scalar_lea.vmem %s5, %s269
      %p271 = pneg %p176
      %p272 = pneg %p173
      %p273 = scmp.lt.s32.totalorder %s19, 1
      %s274 = scalar_select %p273, %s19, 1
      %s275 = scalar_lea.vmem %s6, %s274
      %p276 = pneg %p202
      %p277 = pneg %p199
      %p278 = scmp.lt.s32.totalorder %s19, 1
      %s279 = scalar_select %p278, %s19, 1
      %s280 = scalar_lea.vmem %s7, %s279
      %s281 = smul.u32 2, %s19
      %p282 = scmp.lt.s32.totalorder %s281, 3
      %s283 = scalar_select %p282, %s281, 3
      %s284 = smul.addr %s283, 8
      %s285 = scalar_lea.vmem %s0, %s284
      %s286 = smul.u32 2, %s19
      %s287 = smul.u32 2, %s19
      %p288 = scmp.lt.s32.totalorder %s287, 3
      %s289 = scalar_select %p288, %s287, 3
      %s290 = smul.addr %s289, 8
      %s291 = scalar_lea.vmem %s5, %s290
      %s292 = smul.u32 2, %s19
      %p293 = scmp.lt.s32.totalorder %s19, 1
      %s294 = scalar_select %p293, %s19, 1
      %s295 = scalar_lea.vmem %s6, %s294
      %p296 = scmp.lt.s32.totalorder %s19, 1
      %s297 = scalar_select %p296, %s19, 1
      %s298 = scalar_lea.vmem %s7, %s297
      %v299 = vld [vmem:[%s285] sm:$0xff]
      %v300 = vld [vmem:[%s285 + $0x8] sm:$0xff]
      %v301 = vld [vmem:[%s1] sm:$0xf]
      %v302 = vld [vmem:[%s2] sm:$0x1]
      %v304 = vperm.slane %v302, 0
      %vm306 = vcmask 31744
      %v308 = vsel %vm306, %v299, 0
      %v311 = vsel %vm306, %v300, 0
      %vm313 = vcmask 1043456
      %v315 = vsel %vm313, %v301, 0
      %317 = vmatpush.msra.mxu0 0.0
      %318 = vmatpush.msra.mxu0 0.0
      %319 = vmatpush.msra.mxu0 0.0
      %320 = vmatpush.msra.mxu0 0.0
      %321 = vmatpush.msra.mxu0 0.0
      %322 = vmatpush.msra.mxu0 0.0
      %323 = vmatpush.msra.mxu0 0.0
      %324 = vmatpush.msra.mxu0 0.0
      %325 = vmatpush.msra.mxu0 0.0
      %326 = vmatpush.msra.mxu0 0.0
      %327 = vmatpush.msra.mxu0 0.0
      %328 = vmatpush.msra.mxu0 0.0
      %329 = vmatpush.msra.mxu0 0.0
      %330 = vmatpush.msra.mxu0 0.0
      %331 = vmatpush.msra.mxu0 0.0
      %332 = vmatpush.msra.mxu0 %v315
      %333 = vmatmul.f32.gmra.mxu0 %v308
      %v334 = vpop.f32.mrf.mxu0
      %v335 = vadd.f32 %v304, %v334
      %336 = vmatmul.f32.gmra.mxu0 %v311
      %v337 = vpop.f32.mrf.mxu0
      %v338 = vadd.f32 %v304, %v337
      %339 = vdwg.mxu0
      %v340 = vmax.f32 %v335, 0.0
      %v341 = vmax.f32 %v338, 0.0
      %v342 = vld [vmem:[%s3] sm:$0xff]
      %v343 = vld [vmem:[%s3 + $0x8] sm:$0xff]
      %v344 = vld [vmem:[%s3 + $0x10] sm:$0xff]
      %v345 = vld [vmem:[%s3 + $0x18] sm:$0xff]
      %v346 = vld [vmem:[%s3 + $0x20] sm:$0xff]
      %v347 = vld [vmem:[%s3 + $0x28] sm:$0xff]
      %v348 = vld [vmem:[%s3 + $0x30] sm:$0xff]
      %v349 = vld [vmem:[%s3 + $0x38] sm:$0xff]
      %v350 = vld [vmem:[%s3 + $0x40] sm:$0xff]
      %v351 = vld [vmem:[%s3 + $0x48] sm:$0xff]
      %v352 = vld [vmem:[%s3 + $0x50] sm:$0xff]
      %v353 = vld [vmem:[%s3 + $0x58] sm:$0xff]
      %v354 = vld [vmem:[%s3 + $0x60] sm:$0xff]
      %v355 = vld [vmem:[%s3 + $0x68] sm:$0xff]
      %v356 = vld [vmem:[%s3 + $0x70] sm:$0xff]
      %v357 = vld [vmem:[%s3 + $0x78] sm:$0xff]
      %v358 = vld [vmem:[%s4] sm:$0x1]
      %v360 = vperm.slane %v358, 0
      %362 = vmatpush.msra.mxu0 %v357
      %363 = vmatpush.msra.mxu0 %v356
      %364 = vmatpush.msra.mxu0 %v355
      %365 = vmatpush.msra.mxu0 %v354
      %366 = vmatpush.msra.mxu0 %v353
      %367 = vmatpush.msra.mxu0 %v352
      %368 = vmatpush.msra.mxu0 %v351
      %369 = vmatpush.msra.mxu0 %v350
      %370 = vmatpush.msra.mxu0 %v349
      %371 = vmatpush.msra.mxu0 %v348
      %372 = vmatpush.msra.mxu0 %v347
      %373 = vmatpush.msra.mxu0 %v346
      %374 = vmatpush.msra.mxu0 %v345
      %375 = vmatpush.msra.mxu0 %v344
      %376 = vmatpush.msra.mxu0 %v343
      %377 = vmatpush.msra.mxu0 %v342
      %378 = vmatmul.f32.gmra.mxu0 %v340
      %v379 = vpop.f32.mrf.mxu0
      %v380 = vadd.f32 %v360, %v379
      %381 = vmatmul.f32.gmra.mxu0 %v341
      %v382 = vpop.f32.mrf.mxu0
      %v383 = vadd.f32 %v360, %v382
      %384 = vdwg.mxu0
      %s385 = smul.u32 %s19, 16
      %v386 = vlaneseq
      %v387 = vshrl.u32 %v386, 7
      %v388 = vadd.s32 %v387, 8
      %v389 = vstv %s385
      %v390 = vadd.s32 %v389, %v387
      %v391 = vadd.s32 %v389, %v388
      %vm392 = vcmp.lt.s32.totalorder %v390, 24
      %vm393 = vcmp.lt.s32.totalorder %v391, 24
      %v394 = vsel %vm392, 1, 0
      %v395 = vsel %vm393, 1, 0
      %vm396 = vcmp.eq.s32.totalorder %v394, 1
      %vm397 = vcmp.eq.s32.totalorder %v395, 1
      %v398 = vsel %vm396, %v380, 0.0
      %v399 = vsel %vm397, %v383, 0.0
      %v400 = vadd.f32 %v398, %v399
      %v401 = vrot.slane %v400, 4
      %v402 = vadd.f32 %v400, %v401
      %v403 = vrot.slane %v402, 2
      %v404 = vadd.f32 %v402, %v403
      %v405 = vrot.slane %v404, 1
      %v406 = vadd.f32 %v404, %v405
      %407 = vst [vmem:[%s295] sm:$0x1] %v406
      %v408 = vmul.f32 %v398, %v398
      %v409 = vmul.f32 %v399, %v399
      %v410 = vadd.f32 %v408, %v409
      %v411 = vrot.slane %v410, 4
      %v412 = vadd.f32 %v410, %v411
      %v413 = vrot.slane %v412, 2
      %v414 = vadd.f32 %v412, %v413
      %v415 = vrot.slane %v414, 1
      %v416 = vadd.f32 %v414, %v415
      %417 = vst [vmem:[%s298] sm:$0x1] %v416
      %418 = vst [vmem:[%s291] sm:$0xff] %v380
      %419 = vst [vmem:[%s291 + $0x8] sm:$0xff] %v383
      %s420 = smul.u32 2, %s19
      %p421 = scmp.lt.s32.totalorder %s420, 3
      %s422 = scalar_select %p421, %s420, 3
      %s423 = smul.addr %s422, 8
      %s424 = scalar_lea.vmem %s5, %s423
      %p425 = scmp.lt.s32.totalorder %s19, 1
      %s426 = scalar_select %p425, %s19, 1
      %s427 = scalar_lea.vmem %s6, %s426
      %p428 = scmp.lt.s32.totalorder %s19, 1
      %s429 = scalar_select %p428, %s19, 1
      %s430 = scalar_lea.vmem %s7, %s429
      // Predicated region
      $region41: #{mlp_forward.2} parent=39 // pred_check
        %p431 = pneg %p147
      $region42: #{mlp_forward.2} parent=39 // pred_check_branch
        %433 = sbr.rel (%p431) target = $region44
      $region43: #{mlp_forward.2} parent=39 // pred_region
        %s434 = smul.u32 2, %s19
      $region44: #{mlp_forward.2} parent=39 // pred_fallthru
        _
      // Predicated region
      $region45: #{mlp_forward.2} parent=39 // pred_check
        %p435 = pneg %p173
      $region46: #{mlp_forward.2} parent=39 // pred_check_branch
        %437 = sbr.rel (%p435) target = $region48
      $region47: #{mlp_forward.2} parent=39 // pred_region
        _
      $region48: #{mlp_forward.2} parent=39 // pred_fallthru
        _
      // Predicated region
      $region49: #{mlp_forward.2} parent=39 // pred_check
        %p438 = pneg %p199
      $region50: #{mlp_forward.2} parent=39 // pred_check_branch
        %440 = sbr.rel (%p438) target = $region52
      $region51: #{mlp_forward.2} parent=39 // pred_region
        _
      $region52: #{mlp_forward.2} parent=39 // pred_fallthru
        _
    $region40: #{mlp_forward.2} parent=5 // pred_fallthru
      _
    %p441 = scmp.le.s32.totalorder 2, %s14
    // Predicated region
    $region53: #{mlp_forward.2} parent=5 // pred_check
      %p442 = pneg %p441
    $region54: #{mlp_forward.2} parent=5 // pred_check_branch
      %444 = sbr.rel (%p442) target = $region56
    $region55: #{mlp_forward.2} parent=5 // pred_region
      %s445 = ssub.s32 %s14, 2
      // Predicated region
      $region57: #{mlp_forward.2} parent=55 // pred_check
        %p446 = pneg %p153
      $region58: #{mlp_forward.2} parent=55 // pred_check_branch
        %448 = sbr.rel (%p446) target = $region60
      $region59: #{mlp_forward.2} parent=55 // pred_region
        %s449 = smul.u32 2, %s20
        %p450 = scmp.lt.s32.totalorder %s449, 3
        %s451 = scalar_select %p450, %s449, 3
        %s452 = smul.addr %s451, 8
        %s453 = scalar_lea.vmem %s5, %s452
      $region60: #{mlp_forward.2} parent=55 // pred_fallthru
        _
      // Predicated region
      $region61: #{mlp_forward.2} parent=55 // pred_check
        %p454 = pneg %p179
      $region62: #{mlp_forward.2} parent=55 // pred_check_branch
        %456 = sbr.rel (%p454) target = $region64
      $region63: #{mlp_forward.2} parent=55 // pred_region
        %p457 = scmp.lt.s32.totalorder %s20, 1
        %s458 = scalar_select %p457, %s20, 1
        %s459 = scalar_lea.vmem %s6, %s458
      $region64: #{mlp_forward.2} parent=55 // pred_fallthru
        _
      // Predicated region
      $region65: #{mlp_forward.2} parent=55 // pred_check
        %p460 = pneg %p205
      $region66: #{mlp_forward.2} parent=55 // pred_check_branch
        %462 = sbr.rel (%p460) target = $region68
      $region67: #{mlp_forward.2} parent=55 // pred_region
        %p463 = scmp.lt.s32.totalorder %s20, 1
        %s464 = scalar_select %p463, %s20, 1
        %s465 = scalar_lea.vmem %s7, %s464
      $region68: #{mlp_forward.2} parent=55 // pred_fallthru
        _
    $region56: #{mlp_forward.2} parent=5 // pred_fallthru
      _
  $region6: #{mlp_forward.2} parent=0 // loop_footer
    %s18 = sadd.s32 1, %s14
  $region7: #{mlp_forward.2} parent=0 // loop_footer_branch
    %13 = sbr.rel target = $region3
  $region8: #{mlp_forward.2} parent=0 // loop_exit
    _

</llo_original>
